<compile_context>
chip_gen: v5e
topology: v5e:2x2
jax: 0.10.0
libtpu: 0.0.40
codegen_flags: <defaults>
</compile_context>

<pallas_src>
import functools

import jax
import jax.numpy as jnp
from jax.experimental import pallas as pl
from jax.experimental.pallas import tpu as pltpu

IN_FEATURES = 8
OUT_FEATURES = 1
LANE = 128


def linear_kernel(x_ref, w_ref, b_ref, o_ref):
    # x_ref: (IN, TB)  features on sublanes, batch on lanes (lane-dense).
    # w_ref: (IN, 1)   broadcast across the lane axis.
    # b_ref: (1, 1)    SMEM scalar.
    # o_ref: (1, TB)   lane-dense output tile.
    x = x_ref[...]
    w = w_ref[...]
    b = b_ref[0, 0]
    # VPU elementwise multiply + XLU sublane reduce; no MXU push/pop latency.
    acc = jnp.sum(x * w, axis=0, keepdims=True)        # (1, TB) f32
    o_ref[...] = (acc + b).astype(o_ref.dtype)


def _round_up(n, m):
    return ((n + m - 1) // m) * m


@functools.partial(jax.jit, static_argnames=("block_b",))
def linear_forward(x, weight, bias, block_b=2048):
    """Forward of nn.Linear(8, 1).

    x:      (B, 8) float32
    weight: (1, 8) float32 (PyTorch layout)
    bias:   (1,)   float32
    returns (B, 1) float32
    """
    B = x.shape[0]

    # Wrapper-side layout plumbing: features -> sublanes, batch -> lanes.
    x_t = x.T                                                # (8, B)
    w_t = weight.reshape(OUT_FEATURES, IN_FEATURES).T        # (8, 1)
    b2d = bias.reshape(1, 1)                                 # (1, 1) SMEM scalar

    # Batch tile: lane-dense (multiple of 128); big enough to amortize the
    # per-step pipeline overhead, tiny in VMEM ((8, TB) f32 = 64 KiB at 2048).
    tb = min(block_b, _round_up(B, LANE))
    b_pad = _round_up(B, tb)
    if b_pad != B:
        x_t = jnp.pad(x_t, ((0, 0), (0, b_pad - B)))

    grid = (b_pad // tb,)

    out_t = pl.pallas_call(
        linear_kernel,
        out_shape=jax.ShapeDtypeStruct((OUT_FEATURES, b_pad), jnp.float32),
        grid_spec=pl.GridSpec(
            grid=grid,
            in_specs=[
                # x tile marches along the batch (lane) axis.
                pl.BlockSpec((IN_FEATURES, tb), lambda i: (0, i)),
                # weight: one tiny block, same index every grid step (reused).
                pl.BlockSpec((IN_FEATURES, OUT_FEATURES), lambda i: (0, 0)),
                # bias: scalar in SMEM, no VMEM tile padding / per-step DMA.
                pl.BlockSpec(memory_space=pltpu.MemorySpace.SMEM),
            ],
            out_specs=pl.BlockSpec((OUT_FEATURES, tb), lambda i: (0, i)),
        ),
        compiler_params=pltpu.CompilerParams(
            # Batch axis is embarrassingly parallel -> v7x can shard it across
            # both TensorCores; no effect (and no harm) on v5e/v6e.
            dimension_semantics=("parallel",),
        ),
        cost_estimate=pl.CostEstimate(
            flops=2 * B * IN_FEATURES,
            transcendentals=0,
            bytes_accessed=B * IN_FEATURES * 4   # x
            + B * OUT_FEATURES * 4               # out
            + IN_FEATURES * OUT_FEATURES * 4     # weight
            + OUT_FEATURES * 4,                  # bias
        ),
    )(x_t, w_t, b2d)

    # Back to the PyTorch (B, 1) layout; drop the lane padding.
    return out_t[:, :B].T


if __name__ == "__main__":
    key = jax.random.PRNGKey(0)
    k_x, k_w, k_b = jax.random.split(key, 3)

    batch = 16
    # Deterministic parameter init mimicking nn.Linear's default:
    # uniform(-1/sqrt(in_features), 1/sqrt(in_features)).
    bound = 1.0 / (IN_FEATURES ** 0.5)
    weight = jax.random.uniform(
        k_w, (OUT_FEATURES, IN_FEATURES), jnp.float32, minval=-bound, maxval=bound
    )
    bias = jax.random.uniform(
        k_b, (OUT_FEATURES,), jnp.float32, minval=-bound, maxval=bound
    )
    x = jax.random.normal(k_x, (batch, IN_FEATURES), jnp.float32)

    out = linear_forward(x, weight, bias)
    out = jax.block_until_ready(out)

    # Reference check against plain JAX (same math as torch nn.Linear forward).
    ref = x @ weight.T + bias
    assert out.shape == (batch, OUT_FEATURES)
    assert jnp.allclose(out, ref, atol=1e-5, rtol=1e-5)

    # TODO(synk): training_step / validation_* / evaluate are host-side loss &
    # metric loops, not part of the forward pass, so they are not kernelized.
    print("KERNEL_OK")
</pallas_src>

<mosaic_0001>
module attributes {stable_mosaic.version = 11 : i64} {
  func.func @linear_kernel(%arg0: i32, %arg1: memref<8x128xf32, #tpu.memory_space<vmem>>, %arg2: memref<8x1xf32, #tpu.memory_space<vmem>>, %arg3: memref<1x1xf32, #tpu.memory_space<smem>>, %arg4: memref<1x128xf32, #tpu.memory_space<vmem>>) attributes {dimension_semantics = [#tpu.dimension_semantics<parallel>], iteration_bounds = array<i64: 1>, scalar_prefetch = 0 : i64, scratch_operands = 0 : i64, tpu.core_type = #tpu.core_type<tc>, window_params = [{transform_indices = @transform_0, window_bounds = array<i64: 8, 128>}, {pipeline_mode = #tpu.pipeline_mode<synchronous>, transform_indices = @transform_1, window_bounds = array<i64: 8, 1>}, {transform_indices = @transform_2, window_bounds = array<i64: 1, 1>}, {transform_indices = @transform_3, window_bounds = array<i64: 1, 128>}]} {
    %c0 = arith.constant 0 : index
    %c0_0 = arith.constant 0 : index
    %0 = vector.load %arg1[%c0, %c0_0] : memref<8x128xf32, #tpu.memory_space<vmem>>, vector<8x128xf32>
    %c0_1 = arith.constant 0 : index
    %c0_2 = arith.constant 0 : index
    %1 = vector.load %arg2[%c0_1, %c0_2] : memref<8x1xf32, #tpu.memory_space<vmem>>, vector<8x1xf32>
    %c0_3 = arith.constant 0 : index
    %c0_4 = arith.constant 0 : index
    %2 = memref.load %arg3[%c0_3, %c0_4] : memref<1x1xf32, #tpu.memory_space<smem>>
    %3 = vector.broadcast %1 : vector<8x1xf32> to vector<8x128xf32>
    %4 = arith.mulf %0, %3 : vector<8x128xf32>
    %cst = arith.constant dense<0.000000e+00> : vector<128xf32>
    %5 = vector.multi_reduction <add>, %4, %cst [0] : vector<8x128xf32> to vector<128xf32>
    %6 = vector.shape_cast %5 : vector<128xf32> to vector<1x128xf32>
    %7 = vector.broadcast %2 : f32 to vector<1x128xf32>
    %8 = arith.addf %6, %7 : vector<1x128xf32>
    %c0_5 = arith.constant 0 : index
    %c0_6 = arith.constant 0 : index
    %9 = vector.load %arg4[%c0_5, %c0_6] : memref<1x128xf32, #tpu.memory_space<vmem>>, vector<1x128xf32>
    tpu.vector_store %arg4[%c0_5, %c0_6], %8 {strides = array<i32>} : memref<1x128xf32, #tpu.memory_space<vmem>>, vector<1x128xf32>,
    return
  }
  func.func @transform_0(%arg0: i32) -> (i32, i32) {
    %c0_i32 = arith.constant 0 : i32
    %c0_i32_0 = arith.constant 0 : i32
    return %c0_i32, %arg0 : i32, i32
  }
  func.func @transform_1(%arg0: i32) -> (i32, i32) {
    %c0_i32 = arith.constant 0 : i32
    %c0_i32_0 = arith.constant 0 : i32
    %c0_i32_1 = arith.constant 0 : i32
    return %c0_i32, %c0_i32_0 : i32, i32
  }
  func.func @transform_2(%arg0: i32) -> (i32, i32) {
    %c0_i32 = arith.constant 0 : i32
    %c0_i32_0 = arith.constant 0 : i32
    %c0_i32_1 = arith.constant 0 : i32
    return %c0_i32, %c0_i32_0 : i32, i32
  }
  func.func @transform_3(%arg0: i32) -> (i32, i32) {
    %c0_i32 = arith.constant 0 : i32
    %c0_i32_0 = arith.constant 0 : i32
    return %c0_i32, %arg0 : i32, i32
  }
}

</mosaic_0001>

<llo_original>
// kernel: linear_forward.1
$region0: #{linear_forward.1}
  #allocation0 [shape = 'u32[]', space=smem, size = 0x4, offset = 0x4, fixed_abs, tag = 'smem constant byte address 0x4 - core index']
  #allocation1 [shape = 'u32[72,128]{1,0:T(1,128)}', space=vmem, size = 0x9000, scoped, tag = 'internal scratch']
  #allocation2 [shape = 'f32[1,1]{1,0:T(1,128)S(6)}', space=smem, size = 0x200, scoped, tag = 'scoped memory for linear_forward.1']
  %s0 = inlined_call_operand.vmem [shape: f32[8,128], index: 0, kind: input, shape index: {}]
  %s1 = inlined_call_operand.vmem [shape: f32[8,1], index: 1, kind: input, shape index: {}]
  %s2 = inlined_call_operand.<no memory space> [shape: f32[1,1], index: 2, kind: input, shape index: {}]
  %s3 = inlined_call_operand.vmem [shape: f32[1,128], index: 3, kind: output, shape index: {}]
  %s4 = sld [smem:[#allocation0]]
  $region22: #{linear_forward.1} parent=0
    _
  %s6 = ssub.s32 1, %s4
  %s7 = scalar_select 0, %s6, %s4
  %8 = sst [smem:[#allocation2]] %s2
  // Predicated region
  $region2: #{linear_forward.1} parent=0 // pred_check
    _
  $region3: #{linear_forward.1} parent=0 // pred_check_branch
    %10 = sbr.rel (0) target = $region5
  $region4: #{linear_forward.1} parent=0 // pred_region
    _
  $region5: #{linear_forward.1} parent=0 // pred_fallthru
    _
  // Predicated region
  $region6: #{linear_forward.1} parent=0 // pred_check
    _
  $region7: #{linear_forward.1} parent=0 // pred_check_branch
    %12 = sbr.rel (0) target = $region9
  $region8: #{linear_forward.1} parent=0 // pred_region
    _
  $region9: #{linear_forward.1} parent=0 // pred_fallthru
    _
  // Predicated region
  $region10: #{linear_forward.1} parent=0 // pred_check
    _
  $region11: #{linear_forward.1} parent=0 // pred_check_branch
    %14 = sbr.rel (0) target = $region13
  $region12: #{linear_forward.1} parent=0 // pred_region
    _
  $region13: #{linear_forward.1} parent=0 // pred_fallthru
    _
  %v15 = vld [vmem:[%s0] sm:$0xff]
  %v16 = vld [vmem:[%s1] sm:$0xff]
  %s17 = sld [smem:[#allocation2]]
  %19 = vset.pattern.permute.xlu0 0
  %20 = vperm.xlu0 %19, %v16
  %v21 = vpop.permute.xlu0 %20
  %v23 = vmul.f32 %v15, %v21
  %v24 = vrot.slane %v23, 4
  %v25 = vadd.f32 %v23, %v24
  %v26 = vrot.slane %v25, 2
  %v27 = vadd.f32 %v25, %v26
  %v28 = vrot.slane %v27, 1
  %v29 = vadd.f32 %v27, %v28
  %v30 = vstv %s17
  %v31 = vadd.f32 %v29, %v30
  %32 = vst [vmem:[%s3] sm:$0x1] %v31
  // Predicated region
  $region14: #{linear_forward.1} parent=0 // pred_check
    _
  $region15: #{linear_forward.1} parent=0 // pred_check_branch
    %34 = sbr.rel (0) target = $region17
  $region16: #{linear_forward.1} parent=0 // pred_region
    _
  $region17: #{linear_forward.1} parent=0 // pred_fallthru
    _
  // Predicated region
  $region18: #{linear_forward.1} parent=0 // pred_check
    _
  $region19: #{linear_forward.1} parent=0 // pred_check_branch
    %36 = sbr.rel (0) target = $region21
  $region20: #{linear_forward.1} parent=0 // pred_region
    _
  $region21: #{linear_forward.1} parent=0 // pred_fallthru
    _

</llo_original>
